<compile_context>
chip_gen: v6e
topology: v6e:2x2x1
jax: 0.10.0
libtpu: 0.0.40
codegen_flags: <defaults>
</compile_context>

<pallas_src>
import functools

import jax
import jax.numpy as jnp
from jax.experimental import pallas as pl
from jax.experimental.pallas import tpu as pltpu

LANE = 128
SUBLANE = 8


def _round_up(n, m):
    return ((n + m - 1) // m) * m


def _pad2d(a, rows, cols):
    r, c = a.shape
    return jnp.pad(a, ((0, rows - r), (0, cols - c)))


def vae_encoder_kernel(x_ref, *refs, num_act_layers, slopes):
    """Fused VaeEncoder forward for one batch tile.

    refs layout:
      [w_0, b_0, ..., w_{L-1}, b_{L-1},          # activation layers (first + hidden)
       w_mean, b_mean, w_logvar, b_logvar,       # heads
       mean_out_ref, logvar_out_ref]             # outputs
    Weights are pre-transposed to [in, out] with the weight-norm scale already folded in.
    """
    n_in = 2 * num_act_layers + 4
    in_refs = refs[:n_in]
    mean_ref = refs[n_in]
    logvar_ref = refs[n_in + 1]

    h = x_ref[...]
    for k in range(num_act_layers):
        w = in_refs[2 * k][...]
        b = in_refs[2 * k + 1][...]
        h = jnp.dot(h, w, preferred_element_type=jnp.float32) + b
        h = jnp.where(h >= 0.0, h, slopes[k] * h)  # LeakyReLU
        # TODO(synk): Dropout is identity in eval mode; training-mode dropout masking
        # (with PyTorch RNG semantics) is not reproduced here.

    w_m = in_refs[2 * num_act_layers][...]
    b_m = in_refs[2 * num_act_layers + 1][...]
    w_lv = in_refs[2 * num_act_layers + 2][...]
    b_lv = in_refs[2 * num_act_layers + 3][...]

    mean_ref[...] = (jnp.dot(h, w_m, preferred_element_type=jnp.float32)
                     + b_m).astype(mean_ref.dtype)
    logvar_ref[...] = (jnp.dot(h, w_lv, preferred_element_type=jnp.float32)
                       + b_lv).astype(logvar_ref.dtype)


def _fold_weight_norm(p):
    """w^T = v^T * g / ||v||_F, computed once in f32 outside the kernel."""
    v_T = p["v_T"].astype(jnp.float32)
    g = p["g"].astype(jnp.float32)
    scale = g * jax.lax.rsqrt(jnp.sum(v_T * v_T))
    return v_T * scale, p["b"].astype(jnp.float32)


def vae_encoder_forward(x, params):
    """Single fused pallas_call for the whole encoder. Returns (mean, log_var)."""
    act_layers = params["act_layers"]
    slopes = tuple(float(s) for s in params["slopes"])
    num_act = len(act_layers)

    batch, in_f = x.shape
    out_f = params["mean"]["v_T"].shape[1]

    # Lane-dense padded feature dims.
    dims = [in_f] + [p["v_T"].shape[1] for p in act_layers]
    dims_p = [_round_up(d, LANE) for d in dims]
    out_p = _round_up(out_f, LANE)

    # Batch tiling: sublane-aligned tile, "parallel" grid axis.
    tb = min(128, _round_up(batch, SUBLANE))
    batch_p = _round_up(batch, tb)
    x_p = _pad2d(x.astype(jnp.float32), batch_p, dims_p[0])

    inputs = [x_p]
    in_specs = [pl.BlockSpec((tb, dims_p[0]), lambda i: (i, 0))]

    def add_layer(p, din_p, dout_p):
        w, b = _fold_weight_norm(p)
        inputs.append(_pad2d(w, din_p, dout_p))
        inputs.append(_pad2d(b.reshape(1, -1), 1, dout_p))
        in_specs.append(pl.BlockSpec((din_p, dout_p), lambda i: (0, 0)))
        in_specs.append(pl.BlockSpec((1, dout_p), lambda i: (0, 0)))

    for k, p in enumerate(act_layers):
        add_layer(p, dims_p[k], dims_p[k + 1])
    add_layer(params["mean"], dims_p[-1], out_p)
    add_layer(params["log_var"], dims_p[-1], out_p)

    kernel = functools.partial(vae_encoder_kernel,
                               num_act_layers=num_act, slopes=slopes)
    out_spec = pl.BlockSpec((tb, out_p), lambda i: (i, 0))

    mean_p, logvar_p = pl.pallas_call(
        kernel,
        grid=(batch_p // tb,),
        out_shape=(jax.ShapeDtypeStruct((batch_p, out_p), jnp.float32),
                   jax.ShapeDtypeStruct((batch_p, out_p), jnp.float32)),
        in_specs=in_specs,
        out_specs=(out_spec, out_spec),
        compiler_params=pltpu.CompilerParams(dimension_semantics=("parallel",)),
    )(*inputs)

    return mean_p[:batch, :out_f], logvar_p[:batch, :out_f]


def init_vae_encoder_params(key, in_features, hidden_features, out_features,
                            leaky_relu_slope):
    """Mirror nn.Linear default init + WeightNorm._reset (g = ||w||_F, v = w/g)."""

    def init_block(k, fin, fout):
        kw, kb = jax.random.split(k)
        bound = 1.0 / jnp.sqrt(jnp.float32(fin))
        w = jax.random.uniform(kw, (fout, fin), jnp.float32, -bound, bound)
        b = jax.random.uniform(kb, (fout,), jnp.float32, -bound, bound)
        g = jnp.sqrt(jnp.sum(w * w))
        v = w / g
        return {"v_T": jnp.transpose(v), "g": g, "b": b}

    num_blocks = 1 + max(len(hidden_features) - 1, 0) + 2
    keys = jax.random.split(key, num_blocks)

    act_layers = [init_block(keys[0], in_features, hidden_features[0])]
    slopes = [0.2]  # `first` FcBlock uses the default leaky_relu_slope=0.2
    idx = 1
    for fin, fout in zip(hidden_features, hidden_features[1:]):
        act_layers.append(init_block(keys[idx], fin, fout))
        slopes.append(leaky_relu_slope)
        idx += 1
    mean = init_block(keys[idx], hidden_features[-1], out_features)
    log_var = init_block(keys[idx + 1], hidden_features[-1], out_features)
    return {"act_layers": act_layers, "slopes": tuple(slopes),
            "mean": mean, "log_var": log_var}


def vae_encoder_reference(x, params):
    """Pure-JAX reference for sanity checking."""

    def apply(h, p):
        v_T, g, b = p["v_T"], p["g"], p["b"]
        w_T = v_T * (g / jnp.sqrt(jnp.sum(v_T * v_T)))
        return h @ w_T + b

    h = x
    for p, s in zip(params["act_layers"], params["slopes"]):
        h = apply(h, p)
        h = jnp.where(h >= 0.0, h, s * h)
    return apply(h, params["mean"]), apply(h, params["log_var"])


if __name__ == "__main__":
    # Small shapes consistent with the module: VaeEncoder(16, [32, 32], 8, 0.1, 0.5)
    in_features = 16
    hidden_features = [32, 32]
    out_features = 8
    leaky_relu_slope = 0.1
    batch = 8

    key = jax.random.PRNGKey(0)
    key, kx = jax.random.split(key)
    x = jax.random.normal(kx, (batch, in_features), jnp.float32)

    params = init_vae_encoder_params(key, in_features, hidden_features,
                                     out_features, leaky_relu_slope)

    mean, log_var = vae_encoder_forward(x, params)
    mean, log_var = jax.block_until_ready((mean, log_var))

    mean_ref, log_var_ref = vae_encoder_reference(x, params)
    assert mean.shape == (batch, out_features)
    assert log_var.shape == (batch, out_features)
    assert jnp.allclose(mean, mean_ref, atol=1e-4, rtol=1e-4), "mean mismatch"
    assert jnp.allclose(log_var, log_var_ref, atol=1e-4, rtol=1e-4), "log_var mismatch"

    print("KERNEL_OK")
</pallas_src>

<mosaic_0001>
module attributes {stable_mosaic.version = 11 : i64} {
  func.func @vae_encoder_kernel(%arg0: i32, %arg1: memref<8x128xf32, #tpu.memory_space<vmem>>, %arg2: memref<128x128xf32, #tpu.memory_space<vmem>>, %arg3: memref<1x128xf32, #tpu.memory_space<vmem>>, %arg4: memref<128x128xf32, #tpu.memory_space<vmem>>, %arg5: memref<1x128xf32, #tpu.memory_space<vmem>>, %arg6: memref<128x128xf32, #tpu.memory_space<vmem>>, %arg7: memref<1x128xf32, #tpu.memory_space<vmem>>, %arg8: memref<128x128xf32, #tpu.memory_space<vmem>>, %arg9: memref<1x128xf32, #tpu.memory_space<vmem>>, %arg10: memref<8x128xf32, #tpu.memory_space<vmem>>, %arg11: memref<8x128xf32, #tpu.memory_space<vmem>>) attributes {dimension_semantics = [#tpu.dimension_semantics<parallel>], iteration_bounds = array<i64: 1>, scalar_prefetch = 0 : i64, scratch_operands = 0 : i64, tpu.core_type = #tpu.core_type<tc>, window_params = [{transform_indices = @transform_0, window_bounds = array<i64: 8, 128>}, {pipeline_mode = #tpu.pipeline_mode<synchronous>, transform_indices = @transform_1, window_bounds = array<i64: 128, 128>}, {pipeline_mode = #tpu.pipeline_mode<synchronous>, transform_indices = @transform_2, window_bounds = array<i64: 1, 128>}, {pipeline_mode = #tpu.pipeline_mode<synchronous>, transform_indices = @transform_3, window_bounds = array<i64: 128, 128>}, {pipeline_mode = #tpu.pipeline_mode<synchronous>, transform_indices = @transform_4, window_bounds = array<i64: 1, 128>}, {pipeline_mode = #tpu.pipeline_mode<synchronous>, transform_indices = @transform_5, window_bounds = array<i64: 128, 128>}, {pipeline_mode = #tpu.pipeline_mode<synchronous>, transform_indices = @transform_6, window_bounds = array<i64: 1, 128>}, {pipeline_mode = #tpu.pipeline_mode<synchronous>, transform_indices = @transform_7, window_bounds = array<i64: 128, 128>}, {pipeline_mode = #tpu.pipeline_mode<synchronous>, transform_indices = @transform_8, window_bounds = array<i64: 1, 128>}, {transform_indices = @transform_9, window_bounds = array<i64: 8, 128>}, {transform_indices = @transform_10, window_bounds = array<i64: 8, 128>}]} {
    %c0 = arith.constant 0 : index
    %c0_0 = arith.constant 0 : index
    %0 = vector.load %arg1[%c0, %c0_0] : memref<8x128xf32, #tpu.memory_space<vmem>>, vector<8x128xf32>
    %c0_1 = arith.constant 0 : index
    %c0_2 = arith.constant 0 : index
    %1 = vector.load %arg2[%c0_1, %c0_2] : memref<128x128xf32, #tpu.memory_space<vmem>>, vector<128x128xf32>
    %c0_3 = arith.constant 0 : index
    %c0_4 = arith.constant 0 : index
    %2 = vector.load %arg3[%c0_3, %c0_4] : memref<1x128xf32, #tpu.memory_space<vmem>>, vector<1x128xf32>
    %cst = arith.constant dense<0.000000e+00> : vector<8x128xf32>
    %3 = tpu.matmul %0, %1, %cst {dimension_numbers = #tpu.dot_dimension_numbers<[1], [0], [0], [1], [0, 0, 1, 1], [], []>} : vector<8x128xf32>, vector<128x128xf32>, vector<8x128xf32> -> vector<8x128xf32>
    %4 = vector.broadcast %2 : vector<1x128xf32> to vector<8x128xf32>
    %5 = arith.addf %3, %4 : vector<8x128xf32>
    %cst_5 = arith.constant 0.000000e+00 : f32
    %6 = vector.broadcast %cst_5 : f32 to vector<8x128xf32>
    %7 = arith.cmpf oge, %5, %6 : vector<8x128xf32>
    %cst_6 = arith.constant 2.000000e-01 : f32
    %8 = vector.broadcast %cst_6 : f32 to vector<8x128xf32>
    %9 = arith.mulf %8, %5 : vector<8x128xf32>
    %10 = arith.select %7, %5, %9 : vector<8x128xi1>, vector<8x128xf32>
    %c0_7 = arith.constant 0 : index
    %c0_8 = arith.constant 0 : index
    %11 = vector.load %arg4[%c0_7, %c0_8] : memref<128x128xf32, #tpu.memory_space<vmem>>, vector<128x128xf32>
    %c0_9 = arith.constant 0 : index
    %c0_10 = arith.constant 0 : index
    %12 = vector.load %arg5[%c0_9, %c0_10] : memref<1x128xf32, #tpu.memory_space<vmem>>, vector<1x128xf32>
    %cst_11 = arith.constant dense<0.000000e+00> : vector<8x128xf32>
    %13 = tpu.matmul %10, %11, %cst_11 {dimension_numbers = #tpu.dot_dimension_numbers<[1], [0], [0], [1], [0, 0, 1, 1], [], []>} : vector<8x128xf32>, vector<128x128xf32>, vector<8x128xf32> -> vector<8x128xf32>
    %14 = vector.broadcast %12 : vector<1x128xf32> to vector<8x128xf32>
    %15 = arith.addf %13, %14 : vector<8x128xf32>
    %cst_12 = arith.constant 0.000000e+00 : f32
    %16 = vector.broadcast %cst_12 : f32 to vector<8x128xf32>
    %17 = arith.cmpf oge, %15, %16 : vector<8x128xf32>
    %cst_13 = arith.constant 1.000000e-01 : f32
    %18 = vector.broadcast %cst_13 : f32 to vector<8x128xf32>
    %19 = arith.mulf %18, %15 : vector<8x128xf32>
    %20 = arith.select %17, %15, %19 : vector<8x128xi1>, vector<8x128xf32>
    %c0_14 = arith.constant 0 : index
    %c0_15 = arith.constant 0 : index
    %21 = vector.load %arg6[%c0_14, %c0_15] : memref<128x128xf32, #tpu.memory_space<vmem>>, vector<128x128xf32>
    %c0_16 = arith.constant 0 : index
    %c0_17 = arith.constant 0 : index
    %22 = vector.load %arg7[%c0_16, %c0_17] : memref<1x128xf32, #tpu.memory_space<vmem>>, vector<1x128xf32>
    %c0_18 = arith.constant 0 : index
    %c0_19 = arith.constant 0 : index
    %23 = vector.load %arg8[%c0_18, %c0_19] : memref<128x128xf32, #tpu.memory_space<vmem>>, vector<128x128xf32>
    %c0_20 = arith.constant 0 : index
    %c0_21 = arith.constant 0 : index
    %24 = vector.load %arg9[%c0_20, %c0_21] : memref<1x128xf32, #tpu.memory_space<vmem>>, vector<1x128xf32>
    %cst_22 = arith.constant dense<0.000000e+00> : vector<8x128xf32>
    %25 = tpu.matmul %20, %21, %cst_22 {dimension_numbers = #tpu.dot_dimension_numbers<[1], [0], [0], [1], [0, 0, 1, 1], [], []>} : vector<8x128xf32>, vector<128x128xf32>, vector<8x128xf32> -> vector<8x128xf32>
    %26 = vector.broadcast %22 : vector<1x128xf32> to vector<8x128xf32>
    %27 = arith.addf %25, %26 : vector<8x128xf32>
    %c0_23 = arith.constant 0 : index
    %c0_24 = arith.constant 0 : index
    %28 = vector.load %arg10[%c0_23, %c0_24] : memref<8x128xf32, #tpu.memory_space<vmem>>, vector<8x128xf32>
    tpu.vector_store %arg10[%c0_23, %c0_24], %27 {strides = array<i32>} : memref<8x128xf32, #tpu.memory_space<vmem>>, vector<8x128xf32>,
    %cst_25 = arith.constant dense<0.000000e+00> : vector<8x128xf32>
    %29 = tpu.matmul %20, %23, %cst_25 {dimension_numbers = #tpu.dot_dimension_numbers<[1], [0], [0], [1], [0, 0, 1, 1], [], []>} : vector<8x128xf32>, vector<128x128xf32>, vector<8x128xf32> -> vector<8x128xf32>
    %30 = vector.broadcast %24 : vector<1x128xf32> to vector<8x128xf32>
    %31 = arith.addf %29, %30 : vector<8x128xf32>
    %c0_26 = arith.constant 0 : index
    %c0_27 = arith.constant 0 : index
    %32 = vector.load %arg11[%c0_26, %c0_27] : memref<8x128xf32, #tpu.memory_space<vmem>>, vector<8x128xf32>
    tpu.vector_store %arg11[%c0_26, %c0_27], %31 {strides = array<i32>} : memref<8x128xf32, #tpu.memory_space<vmem>>, vector<8x128xf32>,
    return
  }
  func.func @transform_0(%arg0: i32) -> (i32, i32) {
    %c0_i32 = arith.constant 0 : i32
    %c0_i32_0 = arith.constant 0 : i32
    return %arg0, %c0_i32 : i32, i32
  }
  func.func @transform_1(%arg0: i32) -> (i32, i32) {
    %c0_i32 = arith.constant 0 : i32
    %c0_i32_0 = arith.constant 0 : i32
    %c0_i32_1 = arith.constant 0 : i32
    return %c0_i32, %c0_i32_0 : i32, i32
  }
  func.func @transform_2(%arg0: i32) -> (i32, i32) {
    %c0_i32 = arith.constant 0 : i32
    %c0_i32_0 = arith.constant 0 : i32
    %c0_i32_1 = arith.constant 0 : i32
    return %c0_i32, %c0_i32_0 : i32, i32
  }
  func.func @transform_3(%arg0: i32) -> (i32, i32) {
    %c0_i32 = arith.constant 0 : i32
    %c0_i32_0 = arith.constant 0 : i32
    %c0_i32_1 = arith.constant 0 : i32
    return %c0_i32, %c0_i32_0 : i32, i32
  }
  func.func @transform_4(%arg0: i32) -> (i32, i32) {
    %c0_i32 = arith.constant 0 : i32
    %c0_i32_0 = arith.constant 0 : i32
    %c0_i32_1 = arith.constant 0 : i32
    return %c0_i32, %c0_i32_0 : i32, i32
  }
  func.func @transform_5(%arg0: i32) -> (i32, i32) {
    %c0_i32 = arith.constant 0 : i32
    %c0_i32_0 = arith.constant 0 : i32
    %c0_i32_1 = arith.constant 0 : i32
    return %c0_i32, %c0_i32_0 : i32, i32
  }
  func.func @transform_6(%arg0: i32) -> (i32, i32) {
    %c0_i32 = arith.constant 0 : i32
    %c0_i32_0 = arith.constant 0 : i32
    %c0_i32_1 = arith.constant 0 : i32
    return %c0_i32, %c0_i32_0 : i32, i32
  }
  func.func @transform_7(%arg0: i32) -> (i32, i32) {
    %c0_i32 = arith.constant 0 : i32
    %c0_i32_0 = arith.constant 0 : i32
    %c0_i32_1 = arith.constant 0 : i32
    return %c0_i32, %c0_i32_0 : i32, i32
  }
  func.func @transform_8(%arg0: i32) -> (i32, i32) {
    %c0_i32 = arith.constant 0 : i32
    %c0_i32_0 = arith.constant 0 : i32
    %c0_i32_1 = arith.constant 0 : i32
    return %c0_i32, %c0_i32_0 : i32, i32
  }
  func.func @transform_9(%arg0: i32) -> (i32, i32) {
    %c0_i32 = arith.constant 0 : i32
    %c0_i32_0 = arith.constant 0 : i32
    return %arg0, %c0_i32 : i32, i32
  }
  func.func @transform_10(%arg0: i32) -> (i32, i32) {
    %c0_i32 = arith.constant 0 : i32
    %c0_i32_0 = arith.constant 0 : i32
    return %arg0, %c0_i32 : i32, i32
  }
}

</mosaic_0001>

<llo_original>
// kernel: tpu_custom_call.1
$region0: #{tpu_custom_call.1}
  #allocation0 [shape = 'u32[]', space=smem, size = 0x4, offset = 0x4, fixed_abs, tag = 'smem constant byte address 0x4 - core index']
  #allocation1 [shape = 'u32[144,128]{1,0:T(1,128)}', space=vmem, size = 0x12000, scoped, tag = 'internal scratch']
  %s0 = inlined_call_operand.hbm [shape: f32[8,128], index: 0, kind: input, shape index: {}]
  %s1 = inlined_call_operand.hbm [shape: f32[128,128], index: 1, kind: input, shape index: {}]
  %s2 = inlined_call_operand.vmem [shape: f32[1,128], index: 2, kind: input, shape index: {}]
  %s3 = inlined_call_operand.hbm [shape: f32[128,128], index: 3, kind: input, shape index: {}]
  %s4 = inlined_call_operand.vmem [shape: f32[1,128], index: 4, kind: input, shape index: {}]
  %s5 = inlined_call_operand.hbm [shape: f32[128,128], index: 5, kind: input, shape index: {}]
  %s6 = inlined_call_operand.vmem [shape: f32[1,128], index: 6, kind: input, shape index: {}]
  %s7 = inlined_call_operand.hbm [shape: f32[128,128], index: 7, kind: input, shape index: {}]
  %s8 = inlined_call_operand.vmem [shape: f32[1,128], index: 8, kind: input, shape index: {}]
  %s9 = inlined_call_operand.hbm [shape: f32[8,128], index: 9, kind: output, shape index: {0}]
  %s10 = inlined_call_operand.hbm [shape: f32[8,128], index: 10, kind: output, shape index: {1}]
  %11 = xla_tuple %s9, %s10
  %s12 = sld [smem:[#allocation0]]
  $region74: #{tpu_custom_call.1} parent=0
    _
  %s14 = ssub.s32 1, %s12
  %s15 = scalar_select 0, %s14, %s12
  $region1: #{tpu_custom_call.1} parent=0
    #allocation2 [shape = 'u8[4096]{0}', space=vmem, size = 0x1000, scoped, tag = 'input window, operand 0, single buffered']
    #allocation3 [shape = 's32[1]{0}', space=sflag, size = 0x4, scoped, tag = 'scoped memory for tpu_custom_call.1']
    #allocation4 [shape = 's32[1]{0}', space=sflag, size = 0x4, scoped, tag = 'scoped memory for tpu_custom_call.1']
    #allocation5 [shape = 'u8[65536]{0}', space=vmem, size = 0x10000, scoped, tag = 'input window, operand 1, single buffered']
    #allocation6 [shape = 's32[1]{0}', space=sflag, size = 0x4, scoped, tag = 'scoped memory for tpu_custom_call.1']
    #allocation7 [shape = 'u8[65536]{0}', space=vmem, size = 0x10000, scoped, tag = 'input window, operand 3, single buffered']
    #allocation8 [shape = 'u8[65536]{0}', space=vmem, size = 0x10000, scoped, tag = 'input window, operand 5, single buffered']
    #allocation9 [shape = 's32[1]{0}', space=sflag, size = 0x4, scoped, tag = 'scoped memory for tpu_custom_call.1']
    #allocation10 [shape = 'u8[65536]{0}', space=vmem, size = 0x10000, scoped, tag = 'input window, operand 7, single buffered']
    #allocation11 [shape = 'u8[4096]{0}', space=vmem, size = 0x1000, scoped, tag = 'output window, operand 0, single buffered']
    #allocation12 [shape = 'u8[4096]{0}', space=vmem, size = 0x1000, scoped, tag = 'output window, operand 1, single buffered']
    #allocation13 [shape = 's32[1]{0}', space=sflag, size = 0x4, scoped, tag = 'scoped memory for tpu_custom_call.1']
    %16 = vsyncpa [#allocation3], 0
    %17 = vsyncpa [#allocation6], 0
    %18 = vsyncpa [#allocation9], 0
    %19 = vsyncpa [#allocation4], 0
    %20 = vsyncpa [#allocation13], 0
    // Predicated region
    $region2: #{tpu_custom_call.1} parent=1 // pred_check
      _
    $region3: #{tpu_custom_call.1} parent=1 // pred_check_branch
      %22 = sbr.rel (0) target = $region5
    $region4: #{tpu_custom_call.1} parent=1 // pred_region
      %s24 = ssub.s32 128, 128
      %25 = vsyncadd [#allocation3], %s24
      %s27 = sshll.u32 [#allocation2], 4
      %s28 = int_to_ptr.vmem [resolvable:$true] %s27
      %30 = dma.hbm_to_vmem [thread:$0]  %s0, 128, %s28, [#allocation3]
    $region5: #{tpu_custom_call.1} parent=1 // pred_fallthru
      _
    // Predicated region
    $region6: #{tpu_custom_call.1} parent=1 // pred_check
      _
    $region7: #{tpu_custom_call.1} parent=1 // pred_check_branch
      %32 = sbr.rel (0) target = $region9
    $region8: #{tpu_custom_call.1} parent=1 // pred_region
      %s34 = ssub.s32 2048, 2048
      %35 = vsyncadd [#allocation6], %s34
      %s36 = sshll.u32 [#allocation5], 4
      %s37 = int_to_ptr.vmem [resolvable:$true] %s36
      %42 = dma.hbm_to_vmem [thread:$0]  %s1, 2048, %s37, [#allocation6], 128, 128, 8
    $region9: #{tpu_custom_call.1} parent=1 // pred_fallthru
      _
    // Predicated region
    $region10: #{tpu_custom_call.1} parent=1 // pred_check
      _
    $region11: #{tpu_custom_call.1} parent=1 // pred_check_branch
      %44 = sbr.rel (0) target = $region13
    $region12: #{tpu_custom_call.1} parent=1 // pred_region
      _
    $region13: #{tpu_custom_call.1} parent=1 // pred_fallthru
      _
    // Predicated region
    $region14: #{tpu_custom_call.1} parent=1 // pred_check
      _
    $region15: #{tpu_custom_call.1} parent=1 // pred_check_branch
      %46 = sbr.rel (0) target = $region17
    $region16: #{tpu_custom_call.1} parent=1 // pred_region
      %s48 = ssub.s32 2048, 2048
      %49 = vsyncadd [#allocation6], %s48
      %s50 = sshll.u32 [#allocation7], 4
      %s51 = int_to_ptr.vmem [resolvable:$true] %s50
      %56 = dma.hbm_to_vmem [thread:$0]  %s3, 2048, %s51, [#allocation6], 128, 128, 8
    $region17: #{tpu_custom_call.1} parent=1 // pred_fallthru
      _
    // Predicated region
    $region18: #{tpu_custom_call.1} parent=1 // pred_check
      _
    $region19: #{tpu_custom_call.1} parent=1 // pred_check_branch
      %58 = sbr.rel (0) target = $region21
    $region20: #{tpu_custom_call.1} parent=1 // pred_region
      _
    $region21: #{tpu_custom_call.1} parent=1 // pred_fallthru
      _
    // Predicated region
    $region22: #{tpu_custom_call.1} parent=1 // pred_check
      _
    $region23: #{tpu_custom_call.1} parent=1 // pred_check_branch
      %60 = sbr.rel (0) target = $region25
    $region24: #{tpu_custom_call.1} parent=1 // pred_region
      %s62 = ssub.s32 2048, 2048
      %63 = vsyncadd [#allocation9], %s62
      %s64 = sshll.u32 [#allocation8], 4
      %s65 = int_to_ptr.vmem [resolvable:$true] %s64
      %70 = dma.hbm_to_vmem [thread:$0]  %s5, 2048, %s65, [#allocation9], 128, 128, 8
    $region25: #{tpu_custom_call.1} parent=1 // pred_fallthru
      _
    // Predicated region
    $region26: #{tpu_custom_call.1} parent=1 // pred_check
      _
    $region27: #{tpu_custom_call.1} parent=1 // pred_check_branch
      %72 = sbr.rel (0) target = $region29
    $region28: #{tpu_custom_call.1} parent=1 // pred_region
      _
    $region29: #{tpu_custom_call.1} parent=1 // pred_fallthru
      _
    // Predicated region
    $region30: #{tpu_custom_call.1} parent=1 // pred_check
      _
    $region31: #{tpu_custom_call.1} parent=1 // pred_check_branch
      %74 = sbr.rel (0) target = $region33
    $region32: #{tpu_custom_call.1} parent=1 // pred_region
      %s76 = ssub.s32 2048, 2048
      %77 = vsyncadd [#allocation9], %s76
      %s78 = sshll.u32 [#allocation10], 4
      %s79 = int_to_ptr.vmem [resolvable:$true] %s78
      %84 = dma.hbm_to_vmem [thread:$0]  %s7, 2048, %s79, [#allocation9], 128, 128, 8
    $region33: #{tpu_custom_call.1} parent=1 // pred_fallthru
      _
    // Predicated region
    $region34: #{tpu_custom_call.1} parent=1 // pred_check
      _
    $region35: #{tpu_custom_call.1} parent=1 // pred_check_branch
      %86 = sbr.rel (0) target = $region37
    $region36: #{tpu_custom_call.1} parent=1 // pred_region
      _
    $region37: #{tpu_custom_call.1} parent=1 // pred_fallthru
      _
    // Predicated region
    $region38: #{tpu_custom_call.1} parent=1 // pred_check
      _
    $region39: #{tpu_custom_call.1} parent=1 // pred_check_branch
      %88 = sbr.rel (0) target = $region41
    $region40: #{tpu_custom_call.1} parent=1 // pred_region
      %89 = dma.done [#allocation3], 128
    $region41: #{tpu_custom_call.1} parent=1 // pred_fallthru
      _
    // Predicated region
    $region42: #{tpu_custom_call.1} parent=1 // pred_check
      _
    $region43: #{tpu_custom_call.1} parent=1 // pred_check_branch
      %91 = sbr.rel (0) target = $region45
    $region44: #{tpu_custom_call.1} parent=1 // pred_region
      %92 = dma.done [#allocation6], 2048
    $region45: #{tpu_custom_call.1} parent=1 // pred_fallthru
      _
    // Predicated region
    $region46: #{tpu_custom_call.1} parent=1 // pred_check
      _
    $region47: #{tpu_custom_call.1} parent=1 // pred_check_branch
      %94 = sbr.rel (0) target = $region49
    $region48: #{tpu_custom_call.1} parent=1 // pred_region
      %95 = dma.done [#allocation6], 2048
    $region49: #{tpu_custom_call.1} parent=1 // pred_fallthru
      _
    // Predicated region
    $region50: #{tpu_custom_call.1} parent=1 // pred_check
      _
    $region51: #{tpu_custom_call.1} parent=1 // pred_check_branch
      %97 = sbr.rel (0) target = $region53
    $region52: #{tpu_custom_call.1} parent=1 // pred_region
      %98 = dma.done [#allocation9], 2048
    $region53: #{tpu_custom_call.1} parent=1 // pred_fallthru
      _
    // Predicated region
    $region54: #{tpu_custom_call.1} parent=1 // pred_check
      _
    $region55: #{tpu_custom_call.1} parent=1 // pred_check_branch
      %100 = sbr.rel (0) target = $region57
    $region56: #{tpu_custom_call.1} parent=1 // pred_region
      %101 = dma.done [#allocation9], 2048
    $region57: #{tpu_custom_call.1} parent=1 // pred_fallthru
      _
    %v102 = vld [vmem:[#allocation2] sm:$0xff]
    %v103 = vld [vmem:[#allocation5] sm:$0xff]
    %v104 = vld [vmem:[#allocation5 + $0x8] sm:$0xff]
    %v105 = vld [vmem:[#allocation5 + $0x10] sm:$0xff]
    %v106 = vld [vmem:[#allocation5 + $0x18] sm:$0xff]
    %v107 = vld [vmem:[#allocation5 + $0x20] sm:$0xff]
    %v108 = vld [vmem:[#allocation5 + $0x28] sm:$0xff]
    %v109 = vld [vmem:[#allocation5 + $0x30] sm:$0xff]
    %v110 = vld [vmem:[#allocation5 + $0x38] sm:$0xff]
    %v111 = vld [vmem:[#allocation5 + $0x40] sm:$0xff]
    %v112 = vld [vmem:[#allocation5 + $0x48] sm:$0xff]
    %v113 = vld [vmem:[#allocation5 + $0x50] sm:$0xff]
    %v114 = vld [vmem:[#allocation5 + $0x58] sm:$0xff]
    %v115 = vld [vmem:[#allocation5 + $0x60] sm:$0xff]
    %v116 = vld [vmem:[#allocation5 + $0x68] sm:$0xff]
    %v117 = vld [vmem:[#allocation5 + $0x70] sm:$0xff]
    %v118 = vld [vmem:[#allocation5 + $0x78] sm:$0xff]
    %v119 = vld [vmem:[%s2] sm:$0x1]
    %v121 = vlaneseq
    %v122 = vshrl.u32 %v121, 7
    %v123 = vsub.s32 0, %v122
    %v124 = vrot.slane %v119, %v123
    %126 = vmatprep.subr.mxu0 0.0
    %127 = vmatpush1.msra.mxu0 %v118
    %128 = vmatprep.subr.mxu0 0.0
    %129 = vmatpush1.msra.mxu0 %v117
    %130 = vmatprep.subr.mxu0 0.0
    %131 = vmatpush1.msra.mxu0 %v116
    %132 = vmatprep.subr.mxu0 0.0
    %133 = vmatpush1.msra.mxu0 %v115
    %134 = vmatprep.subr.mxu0 0.0
    %135 = vmatpush1.msra.mxu0 %v114
    %136 = vmatprep.subr.mxu0 0.0
    %137 = vmatpush1.msra.mxu0 %v113
    %138 = vmatprep.subr.mxu0 0.0
    %139 = vmatpush1.msra.mxu0 %v112
    %140 = vmatprep.subr.mxu0 0.0
    %141 = vmatpush1.msra.mxu0 %v111
    %142 = vmatprep.subr.mxu0 0.0
    %143 = vmatpush1.msra.mxu0 %v110
    %144 = vmatprep.subr.mxu0 0.0
    %145 = vmatpush1.msra.mxu0 %v109
    %146 = vmatprep.subr.mxu0 0.0
    %147 = vmatpush1.msra.mxu0 %v108
    %148 = vmatprep.subr.mxu0 0.0
    %149 = vmatpush1.msra.mxu0 %v107
    %150 = vmatprep.subr.mxu0 0.0
    %151 = vmatpush1.msra.mxu0 %v106
    %152 = vmatprep.subr.mxu0 0.0
    %153 = vmatpush1.msra.mxu0 %v105
    %154 = vmatprep.subr.mxu0 0.0
    %155 = vmatpush1.msra.mxu0 %v104
    %156 = vmatprep.subr.mxu0 0.0
    %157 = vmatpush1.msra.mxu0 %v103
    %158 = vmatprep.subr.mxu0 0.0
    %159 = vmatpush2.msra.mxu0 0.0
    %160 = vmatprep.subr.mxu0 0.0
    %161 = vmatpush2.msra.mxu0 0.0
    %162 = vmatprep.subr.mxu0 0.0
    %163 = vmatpush2.msra.mxu0 0.0
    %164 = vmatprep.subr.mxu0 0.0
    %165 = vmatpush2.msra.mxu0 0.0
    %166 = vmatprep.subr.mxu0 0.0
    %167 = vmatpush2.msra.mxu0 0.0
    %168 = vmatprep.subr.mxu0 0.0
    %169 = vmatpush2.msra.mxu0 0.0
    %170 = vmatprep.subr.mxu0 0.0
    %171 = vmatpush2.msra.mxu0 0.0
    %172 = vmatprep.subr.mxu0 0.0
    %173 = vmatpush2.msra.mxu0 0.0
    %174 = vmatprep.subr.mxu0 0.0
    %175 = vmatpush2.msra.mxu0 0.0
    %176 = vmatprep.subr.mxu0 0.0
    %177 = vmatpush2.msra.mxu0 0.0
    %178 = vmatprep.subr.mxu0 0.0
    %179 = vmatpush2.msra.mxu0 0.0
    %180 = vmatprep.subr.mxu0 0.0
    %181 = vmatpush2.msra.mxu0 0.0
    %182 = vmatprep.subr.mxu0 0.0
    %183 = vmatpush2.msra.mxu0 0.0
    %184 = vmatprep.subr.mxu0 0.0
    %185 = vmatpush2.msra.mxu0 0.0
    %186 = vmatprep.subr.mxu0 0.0
    %187 = vmatpush2.msra.mxu0 0.0
    %188 = vmatprep.subr.mxu0 0.0
    %189 = vmatpush2.msra.mxu0 0.0
    %190 = vmatprep.mubr.f32.mxu0 0.0
    %191 = vmatmul.mubr.f32.gmra.mxu0 %v102
    %v192 = vpop.f32.mrf.mxu0
    %v193 = vadd.f32 %v124, %v192
    %v194 = vpop.f32.mrf.mxu0
    %195 = vdwg.mxu0
    %vm196 = vcmp.ge.f32.partialorder %v193, 0.0
    %v197 = vmul.f32 %v193, 0.2
    %v198 = vsel %vm196, %v193, %v197
    %v199 = vld [vmem:[#allocation7] sm:$0xff]
    %v200 = vld [vmem:[#allocation7 + $0x8] sm:$0xff]
    %v201 = vld [vmem:[#allocation7 + $0x10] sm:$0xff]
    %v202 = vld [vmem:[#allocation7 + $0x18] sm:$0xff]
    %v203 = vld [vmem:[#allocation7 + $0x20] sm:$0xff]
    %v204 = vld [vmem:[#allocation7 + $0x28] sm:$0xff]
    %v205 = vld [vmem:[#allocation7 + $0x30] sm:$0xff]
    %v206 = vld [vmem:[#allocation7 + $0x38] sm:$0xff]
    %v207 = vld [vmem:[#allocation7 + $0x40] sm:$0xff]
    %v208 = vld [vmem:[#allocation7 + $0x48] sm:$0xff]
    %v209 = vld [vmem:[#allocation7 + $0x50] sm:$0xff]
    %v210 = vld [vmem:[#allocation7 + $0x58] sm:$0xff]
    %v211 = vld [vmem:[#allocation7 + $0x60] sm:$0xff]
    %v212 = vld [vmem:[#allocation7 + $0x68] sm:$0xff]
    %v213 = vld [vmem:[#allocation7 + $0x70] sm:$0xff]
    %v214 = vld [vmem:[#allocation7 + $0x78] sm:$0xff]
    %v215 = vld [vmem:[%s4] sm:$0x1]
    %v217 = vlaneseq
    %v218 = vshrl.u32 %v217, 7
    %v219 = vsub.s32 0, %v218
    %v220 = vrot.slane %v215, %v219
    %222 = vmatprep.subr.mxu0 0.0
    %223 = vmatpush1.msra.mxu0 %v214
    %224 = vmatprep.subr.mxu0 0.0
    %225 = vmatpush1.msra.mxu0 %v213
    %226 = vmatprep.subr.mxu0 0.0
    %227 = vmatpush1.msra.mxu0 %v212
    %228 = vmatprep.subr.mxu0 0.0
    %229 = vmatpush1.msra.mxu0 %v211
    %230 = vmatprep.subr.mxu0 0.0
    %231 = vmatpush1.msra.mxu0 %v210
    %232 = vmatprep.subr.mxu0 0.0
    %233 = vmatpush1.msra.mxu0 %v209
    %234 = vmatprep.subr.mxu0 0.0
    %235 = vmatpush1.msra.mxu0 %v208
    %236 = vmatprep.subr.mxu0 0.0
    %237 = vmatpush1.msra.mxu0 %v207
    %238 = vmatprep.subr.mxu0 0.0
    %239 = vmatpush1.msra.mxu0 %v206
    %240 = vmatprep.subr.mxu0 0.0
    %241 = vmatpush1.msra.mxu0 %v205
    %242 = vmatprep.subr.mxu0 0.0
    %243 = vmatpush1.msra.mxu0 %v204
    %244 = vmatprep.subr.mxu0 0.0
    %245 = vmatpush1.msra.mxu0 %v203
    %246 = vmatprep.subr.mxu0 0.0
    %247 = vmatpush1.msra.mxu0 %v202
    %248 = vmatprep.subr.mxu0 0.0
    %249 = vmatpush1.msra.mxu0 %v201
    %250 = vmatprep.subr.mxu0 0.0
    %251 = vmatpush1.msra.mxu0 %v200
    %252 = vmatprep.subr.mxu0 0.0
    %253 = vmatpush1.msra.mxu0 %v199
    %254 = vmatprep.subr.mxu0 0.0
    %255 = vmatpush2.msra.mxu0 0.0
    %256 = vmatprep.subr.mxu0 0.0
    %257 = vmatpush2.msra.mxu0 0.0
    %258 = vmatprep.subr.mxu0 0.0
    %259 = vmatpush2.msra.mxu0 0.0
    %260 = vmatprep.subr.mxu0 0.0
    %261 = vmatpush2.msra.mxu0 0.0
    %262 = vmatprep.subr.mxu0 0.0
    %263 = vmatpush2.msra.mxu0 0.0
    %264 = vmatprep.subr.mxu0 0.0
    %265 = vmatpush2.msra.mxu0 0.0
    %266 = vmatprep.subr.mxu0 0.0
    %267 = vmatpush2.msra.mxu0 0.0
    %268 = vmatprep.subr.mxu0 0.0
    %269 = vmatpush2.msra.mxu0 0.0
    %270 = vmatprep.subr.mxu0 0.0
    %271 = vmatpush2.msra.mxu0 0.0
    %272 = vmatprep.subr.mxu0 0.0
    %273 = vmatpush2.msra.mxu0 0.0
    %274 = vmatprep.subr.mxu0 0.0
    %275 = vmatpush2.msra.mxu0 0.0
    %276 = vmatprep.subr.mxu0 0.0
    %277 = vmatpush2.msra.mxu0 0.0
    %278 = vmatprep.subr.mxu0 0.0
    %279 = vmatpush2.msra.mxu0 0.0
    %280 = vmatprep.subr.mxu0 0.0
    %281 = vmatpush2.msra.mxu0 0.0
    %282 = vmatprep.subr.mxu0 0.0
    %283 = vmatpush2.msra.mxu0 0.0
    %284 = vmatprep.subr.mxu0 0.0
    %285 = vmatpush2.msra.mxu0 0.0
    %286 = vmatprep.mubr.f32.mxu0 0.0
    %287 = vmatmul.mubr.f32.gmra.mxu0 %v198
    %v288 = vpop.f32.mrf.mxu0
    %v289 = vadd.f32 %v220, %v288
    %v290 = vpop.f32.mrf.mxu0
    %291 = vdwg.mxu0
    %vm292 = vcmp.ge.f32.partialorder %v289, 0.0
    %v293 = vmul.f32 %v289, 0.1
    %v294 = vsel %vm292, %v289, %v293
    %v295 = vld [vmem:[#allocation8] sm:$0xff]
    %v296 = vld [vmem:[#allocation8 + $0x8] sm:$0xff]
    %v297 = vld [vmem:[#allocation8 + $0x10] sm:$0xff]
    %v298 = vld [vmem:[#allocation8 + $0x18] sm:$0xff]
    %v299 = vld [vmem:[#allocation8 + $0x20] sm:$0xff]
    %v300 = vld [vmem:[#allocation8 + $0x28] sm:$0xff]
    %v301 = vld [vmem:[#allocation8 + $0x30] sm:$0xff]
    %v302 = vld [vmem:[#allocation8 + $0x38] sm:$0xff]
    %v303 = vld [vmem:[#allocation8 + $0x40] sm:$0xff]
    %v304 = vld [vmem:[#allocation8 + $0x48] sm:$0xff]
    %v305 = vld [vmem:[#allocation8 + $0x50] sm:$0xff]
    %v306 = vld [vmem:[#allocation8 + $0x58] sm:$0xff]
    %v307 = vld [vmem:[#allocation8 + $0x60] sm:$0xff]
    %v308 = vld [vmem:[#allocation8 + $0x68] sm:$0xff]
    %v309 = vld [vmem:[#allocation8 + $0x70] sm:$0xff]
    %v310 = vld [vmem:[#allocation8 + $0x78] sm:$0xff]
    %v311 = vld [vmem:[%s6] sm:$0x1]
    %v312 = vld [vmem:[#allocation10] sm:$0xff]
    %v313 = vld [vmem:[#allocation10 + $0x8] sm:$0xff]
    %v314 = vld [vmem:[#allocation10 + $0x10] sm:$0xff]
    %v315 = vld [vmem:[#allocation10 + $0x18] sm:$0xff]
    %v316 = vld [vmem:[#allocation10 + $0x20] sm:$0xff]
    %v317 = vld [vmem:[#allocation10 + $0x28] sm:$0xff]
    %v318 = vld [vmem:[#allocation10 + $0x30] sm:$0xff]
    %v319 = vld [vmem:[#allocation10 + $0x38] sm:$0xff]
    %v320 = vld [vmem:[#allocation10 + $0x40] sm:$0xff]
    %v321 = vld [vmem:[#allocation10 + $0x48] sm:$0xff]
    %v322 = vld [vmem:[#allocation10 + $0x50] sm:$0xff]
    %v323 = vld [vmem:[#allocation10 + $0x58] sm:$0xff]
    %v324 = vld [vmem:[#allocation10 + $0x60] sm:$0xff]
    %v325 = vld [vmem:[#allocation10 + $0x68] sm:$0xff]
    %v326 = vld [vmem:[#allocation10 + $0x70] sm:$0xff]
    %v327 = vld [vmem:[#allocation10 + $0x78] sm:$0xff]
    %v328 = vld [vmem:[%s8] sm:$0x1]
    %v330 = vlaneseq
    %v331 = vshrl.u32 %v330, 7
    %v332 = vsub.s32 0, %v331
    %v333 = vrot.slane %v311, %v332
    %335 = vmatprep.subr.mxu0 0.0
    %336 = vmatpush1.msra.mxu0 %v310
    %337 = vmatprep.subr.mxu0 0.0
    %338 = vmatpush1.msra.mxu0 %v309
    %339 = vmatprep.subr.mxu0 0.0
    %340 = vmatpush1.msra.mxu0 %v308
    %341 = vmatprep.subr.mxu0 0.0
    %342 = vmatpush1.msra.mxu0 %v307
    %343 = vmatprep.subr.mxu0 0.0
    %344 = vmatpush1.msra.mxu0 %v306
    %345 = vmatprep.subr.mxu0 0.0
    %346 = vmatpush1.msra.mxu0 %v305
    %347 = vmatprep.subr.mxu0 0.0
    %348 = vmatpush1.msra.mxu0 %v304
    %349 = vmatprep.subr.mxu0 0.0
    %350 = vmatpush1.msra.mxu0 %v303
    %351 = vmatprep.subr.mxu0 0.0
    %352 = vmatpush1.msra.mxu0 %v302
    %353 = vmatprep.subr.mxu0 0.0
    %354 = vmatpush1.msra.mxu0 %v301
    %355 = vmatprep.subr.mxu0 0.0
    %356 = vmatpush1.msra.mxu0 %v300
    %357 = vmatprep.subr.mxu0 0.0
    %358 = vmatpush1.msra.mxu0 %v299
    %359 = vmatprep.subr.mxu0 0.0
    %360 = vmatpush1.msra.mxu0 %v298
    %361 = vmatprep.subr.mxu0 0.0
    %362 = vmatpush1.msra.mxu0 %v297
    %363 = vmatprep.subr.mxu0 0.0
    %364 = vmatpush1.msra.mxu0 %v296
    %365 = vmatprep.subr.mxu0 0.0
    %366 = vmatpush1.msra.mxu0 %v295
    %367 = vmatprep.subr.mxu0 0.0
    %368 = vmatpush2.msra.mxu0 0.0
    %369 = vmatprep.subr.mxu0 0.0
    %370 = vmatpush2.msra.mxu0 0.0
    %371 = vmatprep.subr.mxu0 0.0
    %372 = vmatpush2.msra.mxu0 0.0
    %373 = vmatprep.subr.mxu0 0.0
    %374 = vmatpush2.msra.mxu0 0.0
    %375 = vmatprep.subr.mxu0 0.0
    %376 = vmatpush2.msra.mxu0 0.0
    %377 = vmatprep.subr.mxu0 0.0
    %378 = vmatpush2.msra.mxu0 0.0
    %379 = vmatprep.subr.mxu0 0.0
    %380 = vmatpush2.msra.mxu0 0.0
    %381 = vmatprep.subr.mxu0 0.0
    %382 = vmatpush2.msra.mxu0 0.0
    %383 = vmatprep.subr.mxu0 0.0
    %384 = vmatpush2.msra.mxu0 0.0
    %385 = vmatprep.subr.mxu0 0.0
    %386 = vmatpush2.msra.mxu0 0.0
    %387 = vmatprep.subr.mxu0 0.0
    %388 = vmatpush2.msra.mxu0 0.0
    %389 = vmatprep.subr.mxu0 0.0
    %390 = vmatpush2.msra.mxu0 0.0
    %391 = vmatprep.subr.mxu0 0.0
    %392 = vmatpush2.msra.mxu0 0.0
    %393 = vmatprep.subr.mxu0 0.0
    %394 = vmatpush2.msra.mxu0 0.0
    %395 = vmatprep.subr.mxu0 0.0
    %396 = vmatpush2.msra.mxu0 0.0
    %397 = vmatprep.subr.mxu0 0.0
    %398 = vmatpush2.msra.mxu0 0.0
    %399 = vmatprep.mubr.f32.mxu0 0.0
    %400 = vmatmul.mubr.f32.gmra.mxu0 %v294
    %v401 = vpop.f32.mrf.mxu0
    %v402 = vadd.f32 %v333, %v401
    %v403 = vpop.f32.mrf.mxu0
    %404 = vdwg.mxu0
    %405 = vst [vmem:[#allocation11] sm:$0xff] %v402
    %v407 = vlaneseq
    %v408 = vshrl.u32 %v407, 7
    %v409 = vsub.s32 0, %v408
    %v410 = vrot.slane %v328, %v409
    %412 = vmatprep.subr.mxu0 0.0
    %413 = vmatpush1.msra.mxu0 %v327
    %414 = vmatprep.subr.mxu0 0.0
    %415 = vmatpush1.msra.mxu0 %v326
    %416 = vmatprep.subr.mxu0 0.0
    %417 = vmatpush1.msra.mxu0 %v325
    %418 = vmatprep.subr.mxu0 0.0
    %419 = vmatpush1.msra.mxu0 %v324
    %420 = vmatprep.subr.mxu0 0.0
    %421 = vmatpush1.msra.mxu0 %v323
    %422 = vmatprep.subr.mxu0 0.0
    %423 = vmatpush1.msra.mxu0 %v322
    %424 = vmatprep.subr.mxu0 0.0
    %425 = vmatpush1.msra.mxu0 %v321
    %426 = vmatprep.subr.mxu0 0.0
    %427 = vmatpush1.msra.mxu0 %v320
    %428 = vmatprep.subr.mxu0 0.0
    %429 = vmatpush1.msra.mxu0 %v319
    %430 = vmatprep.subr.mxu0 0.0
    %431 = vmatpush1.msra.mxu0 %v318
    %432 = vmatprep.subr.mxu0 0.0
    %433 = vmatpush1.msra.mxu0 %v317
    %434 = vmatprep.subr.mxu0 0.0
    %435 = vmatpush1.msra.mxu0 %v316
    %436 = vmatprep.subr.mxu0 0.0
    %437 = vmatpush1.msra.mxu0 %v315
    %438 = vmatprep.subr.mxu0 0.0
    %439 = vmatpush1.msra.mxu0 %v314
    %440 = vmatprep.subr.mxu0 0.0
    %441 = vmatpush1.msra.mxu0 %v313
    %442 = vmatprep.subr.mxu0 0.0
    %443 = vmatpush1.msra.mxu0 %v312
    %444 = vmatprep.subr.mxu0 0.0
    %445 = vmatpush2.msra.mxu0 0.0
    %446 = vmatprep.subr.mxu0 0.0
    %447 = vmatpush2.msra.mxu0 0.0
    %448 = vmatprep.subr.mxu0 0.0
    %449 = vmatpush2.msra.mxu0 0.0
    %450 = vmatprep.subr.mxu0 0.0
    %451 = vmatpush2.msra.mxu0 0.0
    %452 = vmatprep.subr.mxu0 0.0
    %453 = vmatpush2.msra.mxu0 0.0
    %454 = vmatprep.subr.mxu0 0.0
    %455 = vmatpush2.msra.mxu0 0.0
    %456 = vmatprep.subr.mxu0 0.0
    %457 = vmatpush2.msra.mxu0 0.0
    %458 = vmatprep.subr.mxu0 0.0
    %459 = vmatpush2.msra.mxu0 0.0
    %460 = vmatprep.subr.mxu0 0.0
    %461 = vmatpush2.msra.mxu0 0.0
    %462 = vmatprep.subr.mxu0 0.0
    %463 = vmatpush2.msra.mxu0 0.0
    %464 = vmatprep.subr.mxu0 0.0
    %465 = vmatpush2.msra.mxu0 0.0
    %466 = vmatprep.subr.mxu0 0.0
    %467 = vmatpush2.msra.mxu0 0.0
    %468 = vmatprep.subr.mxu0 0.0
    %469 = vmatpush2.msra.mxu0 0.0
    %470 = vmatprep.subr.mxu0 0.0
    %471 = vmatpush2.msra.mxu0 0.0
    %472 = vmatprep.subr.mxu0 0.0
    %473 = vmatpush2.msra.mxu0 0.0
    %474 = vmatprep.subr.mxu0 0.0
    %475 = vmatpush2.msra.mxu0 0.0
    %476 = vmatprep.mubr.f32.mxu0 0.0
    %477 = vmatmul.mubr.f32.gmra.mxu0 %v294
    %v478 = vpop.f32.mrf.mxu0
    %v479 = vadd.f32 %v410, %v478
    %v480 = vpop.f32.mrf.mxu0
    %481 = vdwg.mxu0
    %482 = vst [vmem:[#allocation12] sm:$0xff] %v479
    // Predicated region
    $region58: #{tpu_custom_call.1} parent=1 // pred_check
      _
    $region59: #{tpu_custom_call.1} parent=1 // pred_check_branch
      %484 = sbr.rel (0) target = $region61
    $region60: #{tpu_custom_call.1} parent=1 // pred_region
      %s486 = ssub.s32 128, 128
      %487 = vsyncadd [#allocation4], %s486
      %s489 = sshll.u32 [#allocation11], 4
      %s490 = int_to_ptr.vmem [resolvable:$true] %s489
      %492 = dma.vmem_to_hbm [thread:$0]  %s490, 128, %s9, [#allocation4]
    $region61: #{tpu_custom_call.1} parent=1 // pred_fallthru
      _
    // Predicated region
    $region62: #{tpu_custom_call.1} parent=1 // pred_check
      _
    $region63: #{tpu_custom_call.1} parent=1 // pred_check_branch
      %494 = sbr.rel (0) target = $region65
    $region64: #{tpu_custom_call.1} parent=1 // pred_region
      %s496 = ssub.s32 128, 128
      %497 = vsyncadd [#allocation13], %s496
      %s499 = sshll.u32 [#allocation12], 4
      %s500 = int_to_ptr.vmem [resolvable:$true] %s499
      %502 = dma.vmem_to_hbm [thread:$0]  %s500, 128, %s10, [#allocation13]
    $region65: #{tpu_custom_call.1} parent=1 // pred_fallthru
      _
    // Predicated region
    $region66: #{tpu_custom_call.1} parent=1 // pred_check
      _
    $region67: #{tpu_custom_call.1} parent=1 // pred_check_branch
      %504 = sbr.rel (0) target = $region69
    $region68: #{tpu_custom_call.1} parent=1 // pred_region
      %505 = dma.done [#allocation4], 128
    $region69: #{tpu_custom_call.1} parent=1 // pred_fallthru
      _
    // Predicated region
    $region70: #{tpu_custom_call.1} parent=1 // pred_check
      _
    $region71: #{tpu_custom_call.1} parent=1 // pred_check_branch
      %507 = sbr.rel (0) target = $region73
    $region72: #{tpu_custom_call.1} parent=1 // pred_region
      %508 = dma.done [#allocation13], 128
    $region73: #{tpu_custom_call.1} parent=1 // pred_fallthru
      _
    %509 = vsyncpa [#allocation3], 1
    %510 = vsyncpa [#allocation6], 1
    %511 = vsyncpa [#allocation9], 1
    %512 = vsyncpa [#allocation4], 1
    %513 = vsyncpa [#allocation13], 1

</llo_original>
